<compile_context>
chip_gen: v6e
topology: v6e:2x2x1
jax: 0.10.0
libtpu: 0.0.40
codegen_flags: <defaults>
</compile_context>

<pallas_src>
import functools

import jax
import jax.numpy as jnp
from jax import lax
from jax.experimental import pallas as pl
from jax.experimental.pallas import tpu as pltpu


def _round_up(x, m):
    return (x + m - 1) // m * m


def _vmem_capacity_bytes():
    try:
        info = pltpu.get_tpu_info()
        cap = getattr(info, "vmem_capacity_bytes", None)
        if cap:
            return int(cap)
    except Exception:
        pass
    return 64 * 1024 * 1024  # conservative default (v7x physical VMEM)


def _num_tensorcores():
    try:
        n = getattr(jax.devices()[0], "num_cores", None)
        if n and 1 <= int(n) <= 8:
            return int(n)
    except Exception:
        pass
    return 2  # v7x has 2 TCs; harmless (tiny redundancy) on 1-TC chips


def _contrastive_loss_kernel(o1_ref, o2_ref, t_ref, out_ref, acc_ref, dist_ref, *,
                             margin, scale, total_b, total_d, tile_b, tile_d,
                             nbp, needs_row_mask, needs_col_mask, resident_target):
    c = pl.program_id(0)            # parallel (per-TensorCore) slice
    i = pl.program_id(1)            # batch tile within the slice
    k = pl.program_id(2)            # D chunk
    nb = pl.num_programs(1)
    nd = pl.num_programs(2)

    @pl.when((i == 0) & (k == 0))
    def _init_loss():
        acc_ref[...] = jnp.zeros_like(acc_ref)

    @pl.when(k == 0)
    def _init_dist():
        dist_ref[...] = jnp.zeros_like(dist_ref)

    # Cast AFTER load: HBM traffic stays at the native dtype.
    o1 = o1_ref[...].astype(jnp.float32)               # (tile_b, tile_d)
    o2 = o2_ref[...].astype(jnp.float32)
    diff = o2 - o1
    sq = diff * diff
    if needs_col_mask:
        # Partial last D chunk: unspecified columns may be Inf/NaN -> keep select form.
        col = k * tile_d + lax.broadcasted_iota(jnp.int32, (tile_b, tile_d), 1)
        sq = jnp.where(col < total_d, sq, 0.0)
    dist_ref[...] += jnp.sum(sq, axis=1, keepdims=True)     # (tile_b, 1)

    @pl.when(k == nd - 1)
    def _finish_batch_tile():
        g = c * nbp + i                                 # global batch-tile index
        row_start = g * tile_b
        distances = 1000.0 * dist_ref[...] + 0.001      # (tile_b, 1)
        if resident_target:
            if tile_b % 8 == 0:
                start = pl.multiple_of(row_start, 8)
            else:
                start = 0   # single real tile; duplicated tiles are fully masked below
            t = t_ref[pl.ds(start, tile_b), :]
        else:
            t = t_ref[...]
        t = t.astype(jnp.float32)
        hinge = jnp.maximum(margin - jnp.sqrt(distances), 0.0)
        losses = 0.5 * (t * distances + (1.0 - t) * hinge * hinge)   # (tile_b, 1)
        if needs_row_mask:
            # Rows past the true batch (or duplicated clamped tiles) can carry
            # Inf/NaN -> MUST stay a select before the reduction.
            row = row_start + lax.broadcasted_iota(jnp.int32, (tile_b, 1), 0)
            losses = jnp.where(row < total_b, losses, 0.0)
        acc_ref[...] += jnp.sum(losses, axis=0, keepdims=True)

    @pl.when((i == nb - 1) & (k == nd - 1))
    def _finalize():
        # One lane-dense output block per parallel slice; wrapper sums the partials.
        out_ref[...] = jnp.broadcast_to(acc_ref[...] * scale, out_ref.shape)


def contrastive_loss(output1, output2, target, *, margin=1.0, use_domain=1.0,
                     size_average=True, block_b=1024, block_d=None,
                     force_pallas=False):
    """Pallas TPU implementation of ContrastiveLoss.forward."""
    assert output1.shape == output2.shape and output1.ndim == 2
    B, D = output1.shape
    itemsize = jnp.dtype(output1.dtype).itemsize

    # Tiny problems or lane-sparse feature dims (D < 128 pads 128 lanes / wastes
    # VPU lanes): let XLA fuse it instead of paying fixed pallas_call overhead.
    # TODO(synk): pack small-D rows lane-dense ((B,D)->(B*D//128,128)) instead of
    # falling back, for the case where B is huge but D < 128.
    if not force_pallas and (2 * B * D * itemsize < (1 << 20) or D < 128):
        return _reference(output1, output2, target, margin=margin,
                          use_domain=use_domain, size_average=size_average)

    num_partials = _num_tensorcores()
    vmem_cap = _vmem_capacity_bytes()
    budget = vmem_cap // 2                      # per-step working-set budget
    pack = max(8, 32 // itemsize)               # sublane pack: 8 f32 / 16 bf16 / 32 int8

    # ---------------- batch tile ----------------
    tile_b = min(int(block_b), B)
    aligned = max(pack, (tile_b // pack) * pack)
    tile_b = aligned if aligned <= B else B     # tiny batch: single full-dim tile

    def step_bytes(tb, td):
        return (4 * tb * td * itemsize          # 2 inputs x double buffer (native dtype)
                + 3 * tb * td * 4               # f32 upcasts / diff / sq temporaries
                + _round_up(tb, 8) * 512)       # (tb,1) f32 distance scratch (lane-padded)

    # ---------------- feature (D) tile ----------------
    if block_d is not None:
        tile_d = min(int(block_d), D)
        if tile_d < D:
            tile_d = max(128, (tile_d // 128) * 128)
    elif D <= 128 or step_bytes(tile_b, D) <= budget:
        tile_d = D
    else:
        # Chunk D (multiples of 128) so the batch tile can stay large.
        per_col = tile_b * (4 * itemsize + 12)
        tile_d = max(128, ((budget - _round_up(tile_b, 8) * 512) // per_col) // 128 * 128)
    if tile_d >= D:
        tile_d = D
    num_d = -(-D // tile_d)

    # If even a single (tile_b, tile_d) step is too big, shrink the batch tile.
    while tile_b > pack and step_bytes(tile_b, tile_d) > budget:
        tile_b = max(pack, (tile_b // 2 // pack) * pack)

    num_b_tiles = -(-B // tile_b)
    nbp = -(-num_b_tiles // num_partials)       # batch tiles per parallel slice
    coverage = num_partials * nbp * tile_b
    needs_row_mask = coverage != B
    needs_col_mask = (num_d > 1) and (D % tile_d != 0)
    b_pad = coverage

    # ---------------- target ----------------
    # Resident single-DMA copy when small (B_pad rows pad to 512 B/row in VMEM),
    # otherwise per-tile blocks. Padding makes every dynamic slice in-bounds.
    t = target.astype(jnp.float32).reshape(B, 1)
    if b_pad > B:
        t = jnp.pad(t, ((0, b_pad - B), (0, 0)))
    resident_target = (b_pad * 512 <= (2 << 20)) or (tile_b % 8 != 0)

    max_blk_b = num_b_tiles - 1
    if num_partials * nbp == num_b_tiles:
        def io_map(c, i, k):
            return (c * nbp + i, k)
    else:
        # Some trailing tiles of the last parallel slice fall past the batch:
        # clamp the block index (their rows are fully masked in the kernel).
        def io_map(c, i, k):
            return (jnp.minimum(c * nbp + i, max_blk_b), k)

    if resident_target:
        t_spec = pl.BlockSpec((b_pad, 1), lambda c, i, k: (0, 0))
    else:
        t_spec = pl.BlockSpec((tile_b, 1), lambda c, i, k: (c * nbp + i, 0))

    scale = float(use_domain) * ((1.0 / B) if size_average else 1.0)

    kernel = functools.partial(
        _contrastive_loss_kernel,
        margin=float(margin), scale=scale, total_b=int(B), total_d=int(D),
        tile_b=int(tile_b), tile_d=int(tile_d), nbp=int(nbp),
        needs_row_mask=bool(needs_row_mask), needs_col_mask=bool(needs_col_mask),
        resident_target=bool(resident_target))

    # Explicit VMEM limit sized from the honest per-step estimate (inputs + f32
    # temps + target + scratch), capped below each generation's physical VMEM.
    target_vmem = 2 * (b_pad if resident_target else 2 * tile_b) * 512
    est_peak = step_bytes(tile_b, tile_d) + target_vmem + (256 << 10)
    vmem_limit = int(min(vmem_cap - (4 << 20), max(est_peak + (8 << 20), 32 << 20)))
    vmem_limit = max(vmem_limit, 16 << 20)

    cost = pl.CostEstimate(
        flops=3 * B * D + 12 * B,
        transcendentals=B,
        bytes_accessed=2 * B * D * itemsize + b_pad * 4 + num_partials * 8 * 128 * 4)

    out = pl.pallas_call(
        kernel,
        out_shape=jax.ShapeDtypeStruct((num_partials, 8, 128), jnp.float32),
        grid_spec=pltpu.PrefetchScalarGridSpec(
            num_scalar_prefetch=0,
            grid=(num_partials, nbp, num_d),
            in_specs=[
                pl.BlockSpec((tile_b, tile_d), io_map),
                pl.BlockSpec((tile_b, tile_d), io_map),
                t_spec,
            ],
            out_specs=pl.BlockSpec((1, 8, 128), lambda c, i, k: (c, 0, 0)),
            scratch_shapes=[
                pltpu.VMEM((1, 1), jnp.float32),        # running loss partial sum
                pltpu.VMEM((tile_b, 1), jnp.float32),   # per-row squared-distance acc
            ],
        ),
        compiler_params=pltpu.CompilerParams(
            dimension_semantics=("parallel", "arbitrary", "arbitrary"),
            vmem_limit_bytes=vmem_limit),
        cost_estimate=cost,
    )(output1, output2, t)
    return out[:, 0, 0].sum()


def _reference(output1, output2, target, margin=1.0, use_domain=1.0,
               size_average=True):
    o1 = output1.astype(jnp.float32)
    o2 = output2.astype(jnp.float32)
    tgt = target.astype(jnp.float32)
    distances = 1000.0 * jnp.sum((o2 - o1) ** 2, axis=1) + 0.001
    losses = 0.5 * (tgt * distances
                    + (1.0 - tgt)
                    * jnp.maximum(margin - jnp.sqrt(distances), 0.0) ** 2)
    losses = losses * use_domain
    return jnp.mean(losses) if size_average else jnp.sum(losses)


if __name__ == "__main__":
    # Test 1: small f32 problem (single tile, num_d=1), mean reduction.
    key = jax.random.PRNGKey(0)
    k1, k2, k3 = jax.random.split(key, 3)
    B, D = 8, 32
    output1 = jax.random.normal(k1, (B, D), dtype=jnp.float32)
    output2 = jax.random.normal(k2, (B, D), dtype=jnp.float32)
    target = jax.random.bernoulli(k3, 0.5, (B,)).astype(jnp.int32)

    loss = contrastive_loss(output1, output2, target, margin=1.0,
                            use_domain=1.0, size_average=True, force_pallas=True)
    loss = jax.block_until_ready(loss)
    ref = _reference(output1, output2, target)
    assert jnp.allclose(loss, ref, rtol=1e-4, atol=1e-4), (loss, ref)

    # Test 2: bf16 inputs, batch not a multiple of the tile (partial-tile mask,
    # clamped trailing tiles on the parallel axis, resident target), sum
    # reduction with a use_domain scale.
    k4, k5, k6 = jax.random.split(jax.random.PRNGKey(1), 3)
    B2, D2 = 300, 128
    o1b = jax.random.normal(k4, (B2, D2), dtype=jnp.bfloat16)
    o2b = jax.random.normal(k5, (B2, D2), dtype=jnp.bfloat16)
    tb = jax.random.bernoulli(k6, 0.5, (B2,)).astype(jnp.int32)

    loss2 = contrastive_loss(o1b, o2b, tb, margin=1.0, use_domain=0.5,
                             size_average=False, block_b=128, force_pallas=True)
    loss2 = jax.block_until_ready(loss2)
    ref2 = _reference(o1b, o2b, tb, margin=1.0, use_domain=0.5,
                      size_average=False)
    assert jnp.allclose(loss2, ref2, rtol=1e-3, atol=1e-2), (loss2, ref2)

    # Test 3: forced D-chunking (num_d=3, partial last D chunk -> column mask),
    # f32, mean reduction.
    k7, k8, k9 = jax.random.split(jax.random.PRNGKey(2), 3)
    B3, D3 = 64, 320
    o1c = jax.random.normal(k7, (B3, D3), dtype=jnp.float32)
    o2c = jax.random.normal(k8, (B3, D3), dtype=jnp.float32)
    tc = jax.random.bernoulli(k9, 0.5, (B3,)).astype(jnp.int32)

    loss3 = contrastive_loss(o1c, o2c, tc, margin=1.0, use_domain=1.0,
                             size_average=True, block_d=128, force_pallas=True)
    loss3 = jax.block_until_ready(loss3)
    ref3 = _reference(o1c, o2c, tc)
    assert jnp.allclose(loss3, ref3, rtol=1e-4, atol=1e-3), (loss3, ref3)

    print("KERNEL_OK")
</pallas_src>

<mosaic_0001>
module attributes {stable_mosaic.version = 11 : i64} {
  func.func @_contrastive_loss_kernel(%arg0: i32, %arg1: i32, %arg2: i32, %arg3: memref<8x32xf32, #tpu.memory_space<vmem>>, %arg4: memref<8x32xf32, #tpu.memory_space<vmem>>, %arg5: memref<16x1xf32, #tpu.memory_space<vmem>>, %arg6: memref<1x8x128xf32, #tpu.memory_space<vmem>>, %arg7: memref<1x1xf32, #tpu.memory_space<vmem>>, %arg8: memref<8x1xf32, #tpu.memory_space<vmem>>) attributes {dimension_semantics = [#tpu.dimension_semantics<parallel>, #tpu.dimension_semantics<arbitrary>, #tpu.dimension_semantics<arbitrary>], iteration_bounds = array<i64: 2, 1, 1>, scalar_prefetch = 0 : i64, scratch_operands = 2 : i64, tpu.core_type = #tpu.core_type<tc>, window_params = [{transform_indices = @transform_0, window_bounds = array<i64: 8, 32>}, {transform_indices = @transform_1, window_bounds = array<i64: 8, 32>}, {pipeline_mode = #tpu.pipeline_mode<synchronous>, transform_indices = @transform_2, window_bounds = array<i64: 16, 1>}, {transform_indices = @transform_3, window_bounds = array<i64: 1, 8, 128>}]} {
    %c0_i32 = arith.constant 0 : i32
    %0 = arith.cmpi eq, %arg1, %c0_i32 : i32
    %c0_i32_0 = arith.constant 0 : i32
    %1 = arith.cmpi eq, %arg2, %c0_i32_0 : i32
    %2 = arith.andi %0, %1 : i1
    %3 = arith.extui %2 : i1 to i32
    %c0_i32_1 = arith.constant 0 : i32
    %4 = arith.cmpi ne, %3, %c0_i32_1 : i32
    scf.if %4 {
      %cst_16 = arith.constant 0.000000e+00 : f32
      %25 = vector.broadcast %cst_16 : f32 to vector<1x1xf32>
      %c0_17 = arith.constant 0 : index
      %c0_18 = arith.constant 0 : index
      %26 = vector.load %arg7[%c0_17, %c0_18] : memref<1x1xf32, #tpu.memory_space<vmem>>, vector<1x1xf32>
      tpu.vector_store %arg7[%c0_17, %c0_18], %25 {strides = array<i32>} : memref<1x1xf32, #tpu.memory_space<vmem>>, vector<1x1xf32>,
    } else {
    }
    %c0_i32_2 = arith.constant 0 : i32
    %5 = arith.cmpi eq, %arg2, %c0_i32_2 : i32
    %6 = arith.extui %5 : i1 to i32
    %c0_i32_3 = arith.constant 0 : i32
    %7 = arith.cmpi ne, %6, %c0_i32_3 : i32
    scf.if %7 {
      %cst_16 = arith.constant 0.000000e+00 : f32
      %25 = vector.broadcast %cst_16 : f32 to vector<8x1xf32>
      %c0_17 = arith.constant 0 : index
      %c0_18 = arith.constant 0 : index
      %26 = vector.load %arg8[%c0_17, %c0_18] : memref<8x1xf32, #tpu.memory_space<vmem>>, vector<8x1xf32>
      tpu.vector_store %arg8[%c0_17, %c0_18], %25 {strides = array<i32>} : memref<8x1xf32, #tpu.memory_space<vmem>>, vector<8x1xf32>,
    } else {
    }
    %c0 = arith.constant 0 : index
    %c0_4 = arith.constant 0 : index
    %8 = vector.load %arg3[%c0, %c0_4] : memref<8x32xf32, #tpu.memory_space<vmem>>, vector<8x32xf32>
    %c0_5 = arith.constant 0 : index
    %c0_6 = arith.constant 0 : index
    %9 = vector.load %arg4[%c0_5, %c0_6] : memref<8x32xf32, #tpu.memory_space<vmem>>, vector<8x32xf32>
    %10 = arith.subf %9, %8 : vector<8x32xf32>
    %11 = arith.mulf %10, %10 : vector<8x32xf32>
    %c0_7 = arith.constant 0 : index
    %c0_8 = arith.constant 0 : index
    %12 = vector.load %arg8[%c0_7, %c0_8] : memref<8x1xf32, #tpu.memory_space<vmem>>, vector<8x1xf32>
    %cst = arith.constant dense<0.000000e+00> : vector<8xf32>
    %13 = vector.multi_reduction <add>, %11, %cst [1] : vector<8x32xf32> to vector<8xf32>
    %14 = vector.shape_cast %13 : vector<8xf32> to vector<8x1xf32>
    %15 = arith.addf %12, %14 : vector<8x1xf32>
    %c0_9 = arith.constant 0 : index
    %c0_10 = arith.constant 0 : index
    %16 = vector.load %arg8[%c0_9, %c0_10] : memref<8x1xf32, #tpu.memory_space<vmem>>, vector<8x1xf32>
    tpu.vector_store %arg8[%c0_9, %c0_10], %15 {strides = array<i32>} : memref<8x1xf32, #tpu.memory_space<vmem>>, vector<8x1xf32>,
    %c0_i32_11 = arith.constant 0 : i32
    %17 = arith.cmpi eq, %arg2, %c0_i32_11 : i32
    %18 = arith.extui %17 : i1 to i32
    %c0_i32_12 = arith.constant 0 : i32
    %19 = arith.cmpi ne, %18, %c0_i32_12 : i32
    scf.if %19 {
      %c1_i32 = arith.constant 1 : i32
      %25 = arith.muli %arg0, %c1_i32 : i32
      %26 = arith.addi %25, %arg1 : i32
      %c8_i32 = arith.constant 8 : i32
      %27 = arith.muli %26, %c8_i32 : i32
      %c0_16 = arith.constant 0 : index
      %c0_17 = arith.constant 0 : index
      %28 = vector.load %arg8[%c0_16, %c0_17] : memref<8x1xf32, #tpu.memory_space<vmem>>, vector<8x1xf32>
      %cst_18 = arith.constant 1.000000e+03 : f32
      %29 = vector.broadcast %cst_18 : f32 to vector<8x1xf32>
      %30 = arith.mulf %29, %28 : vector<8x1xf32>
      %cst_19 = arith.constant 1.000000e-03 : f32
      %31 = vector.broadcast %cst_19 : f32 to vector<8x1xf32>
      %32 = arith.addf %30, %31 : vector<8x1xf32>
      %33 = tpu.assume_multiple %27, 8 : i32
      %34 = arith.index_cast %33 : i32 to index
      %c0_20 = arith.constant 0 : index
      %35 = vector.load %arg5[%34, %c0_20] : memref<16x1xf32, #tpu.memory_space<vmem>>, vector<8x1xf32>
      %36 = math.sqrt %32 : vector<8x1xf32>
      %cst_21 = arith.constant 1.000000e+00 : f32
      %37 = vector.broadcast %cst_21 : f32 to vector<8x1xf32>
      %38 = arith.subf %37, %36 : vector<8x1xf32>
      %cst_22 = arith.constant 0.000000e+00 : f32
      %39 = vector.broadcast %cst_22 : f32 to vector<8x1xf32>
      %40 = arith.maximumf %38, %39 : vector<8x1xf32>
      %41 = arith.mulf %35, %32 : vector<8x1xf32>
      %cst_23 = arith.constant 1.000000e+00 : f32
      %42 = vector.broadcast %cst_23 : f32 to vector<8x1xf32>
      %43 = arith.subf %42, %35 : vector<8x1xf32>
      %44 = arith.mulf %43, %40 : vector<8x1xf32>
      %45 = arith.mulf %44, %40 : vector<8x1xf32>
      %46 = arith.addf %41, %45 : vector<8x1xf32>
      %cst_24 = arith.constant 5.000000e-01 : f32
      %47 = vector.broadcast %cst_24 : f32 to vector<8x1xf32>
      %48 = arith.mulf %47, %46 : vector<8x1xf32>
      %49 = tpu.iota {dimensions = array<i32: 0>} : vector<8x1xi32>
      %50 = vector.broadcast %27 : i32 to vector<8x1xi32>
      %51 = arith.addi %50, %49 : vector<8x1xi32>
      %c8_i32_25 = arith.constant 8 : i32
      %52 = vector.broadcast %c8_i32_25 : i32 to vector<8x1xi32>
      %53 = arith.cmpi slt, %51, %52 : vector<8x1xi32>
      %cst_26 = arith.constant 0.000000e+00 : f32
      %54 = vector.broadcast %cst_26 : f32 to vector<8x1xf32>
      %55 = arith.select %53, %48, %54 : vector<8x1xi1>, vector<8x1xf32>
      %c0_27 = arith.constant 0 : index
      %c0_28 = arith.constant 0 : index
      %56 = vector.load %arg7[%c0_27, %c0_28] : memref<1x1xf32, #tpu.memory_space<vmem>>, vector<1x1xf32>
      %cst_29 = arith.constant dense<0.000000e+00> : vector<1xf32>
      %57 = vector.multi_reduction <add>, %55, %cst_29 [0] : vector<8x1xf32> to vector<1xf32>
      %58 = vector.shape_cast %57 : vector<1xf32> to vector<1x1xf32>
      %59 = arith.addf %56, %58 : vector<1x1xf32>
      %c0_30 = arith.constant 0 : index
      %c0_31 = arith.constant 0 : index
      %60 = vector.load %arg7[%c0_30, %c0_31] : memref<1x1xf32, #tpu.memory_space<vmem>>, vector<1x1xf32>
      tpu.vector_store %arg7[%c0_30, %c0_31], %59 {strides = array<i32>} : memref<1x1xf32, #tpu.memory_space<vmem>>, vector<1x1xf32>,
    } else {
    }
    %c0_i32_13 = arith.constant 0 : i32
    %20 = arith.cmpi eq, %arg1, %c0_i32_13 : i32
    %c0_i32_14 = arith.constant 0 : i32
    %21 = arith.cmpi eq, %arg2, %c0_i32_14 : i32
    %22 = arith.andi %20, %21 : i1
    %23 = arith.extui %22 : i1 to i32
    %c0_i32_15 = arith.constant 0 : i32
    %24 = arith.cmpi ne, %23, %c0_i32_15 : i32
    scf.if %24 {
      %c0_16 = arith.constant 0 : index
      %c0_17 = arith.constant 0 : index
      %25 = vector.load %arg7[%c0_16, %c0_17] : memref<1x1xf32, #tpu.memory_space<vmem>>, vector<1x1xf32>
      %cst_18 = arith.constant 1.250000e-01 : f32
      %26 = vector.broadcast %cst_18 : f32 to vector<1x1xf32>
      %27 = arith.mulf %25, %26 : vector<1x1xf32>
      %28 = vector.shape_cast %27 : vector<1x1xf32> to vector<1x1x1xf32>
      %29 = vector.broadcast %28 : vector<1x1x1xf32> to vector<1x8x128xf32>
      %c0_19 = arith.constant 0 : index
      %c0_20 = arith.constant 0 : index
      %c0_21 = arith.constant 0 : index
      %30 = vector.load %arg6[%c0_19, %c0_20, %c0_21] : memref<1x8x128xf32, #tpu.memory_space<vmem>>, vector<1x8x128xf32>
      tpu.vector_store %arg6[%c0_19, %c0_20, %c0_21], %29 {strides = array<i32>} : memref<1x8x128xf32, #tpu.memory_space<vmem>>, vector<1x8x128xf32>,
    } else {
    }
    return
  }
  func.func @transform_0(%arg0: i32, %arg1: i32, %arg2: i32) -> (i32, i32) {
    %c1_i32 = arith.constant 1 : i32
    %0 = arith.muli %arg0, %c1_i32 : i32
    %1 = arith.addi %0, %arg1 : i32
    %c0_i32 = arith.constant 0 : i32
    %2 = arith.minsi %1, %c0_i32 : i32
    %c0_i32_0 = arith.constant 0 : i32
    return %2, %arg2 : i32, i32
  }
  func.func @transform_1(%arg0: i32, %arg1: i32, %arg2: i32) -> (i32, i32) {
    %c1_i32 = arith.constant 1 : i32
    %0 = arith.muli %arg0, %c1_i32 : i32
    %1 = arith.addi %0, %arg1 : i32
    %c0_i32 = arith.constant 0 : i32
    %2 = arith.minsi %1, %c0_i32 : i32
    %c0_i32_0 = arith.constant 0 : i32
    return %2, %arg2 : i32, i32
  }
  func.func @transform_2(%arg0: i32, %arg1: i32, %arg2: i32) -> (i32, i32) {
    %c0_i32 = arith.constant 0 : i32
    %c0_i32_0 = arith.constant 0 : i32
    %c0_i32_1 = arith.constant 0 : i32
    return %c0_i32, %c0_i32_0 : i32, i32
  }
  func.func @transform_3(%arg0: i32, %arg1: i32, %arg2: i32) -> (i32, i32, i32) {
    %c0_i32 = arith.constant 0 : i32
    %c0_i32_0 = arith.constant 0 : i32
    %c0_i32_1 = arith.constant 0 : i32
    return %arg0, %c0_i32, %c0_i32_0 : i32, i32, i32
  }
}

</mosaic_0001>

<llo_original>
// kernel: tpu_custom_call.1
$region0: #{tpu_custom_call.1}
  #allocation0 [shape = 'u32[]', space=smem, size = 0x4, offset = 0x4, fixed_abs, tag = 'smem constant byte address 0x4 - core index']
  #allocation1 [shape = 'u32[144,128]{1,0:T(1,128)}', space=vmem, size = 0x12000, scoped, tag = 'internal scratch']
  #allocation2 [shape = 'f32[1,1]{1,0:T(1,128)}', space=vmem, size = 0x200, scoped, tag = 'scratch operand']
  #allocation3 [shape = 'f32[8,1]{1,0:T(8,128)}', space=vmem, size = 0x1000, scoped, tag = 'scratch operand']
  %s0 = inlined_call_operand.vmem [shape: f32[8,32], index: 0, kind: input, shape index: {}]
  %s1 = inlined_call_operand.vmem [shape: f32[8,32], index: 1, kind: input, shape index: {}]
  %s2 = inlined_call_operand.vmem [shape: f32[16,1], index: 2, kind: input, shape index: {}]
  %s3 = inlined_call_operand.hbm [shape: f32[2,8,128], index: 3, kind: output, shape index: {}]
  %s4 = sld [smem:[#allocation0]]
  $region61: #{tpu_custom_call.1} parent=0
    _
  %s6 = ssub.s32 1, %s4
  %s7 = scalar_select 0, %s6, %s4
  $region1: #{tpu_custom_call.1} parent=0
    #allocation4 [shape = 'u8[8192]{0}', space=vmem, size = 0x2000, scoped, tag = 'output window, operand 0']
    #allocation5 [shape = 's32[2]{0}', space=sflag, size = 0x8, scoped, tag = 'scoped memory for tpu_custom_call.1']
    %8 = vsyncpa [#allocation5], 0
    %s9 = scalar_lea.sflag [#allocation5], 1
    %10 = vsyncpa %s9, 0
    loop: start=0, step=1, limit=4
    $region2: #{tpu_custom_call.1} parent=1 // loop_pre_header
      _
    $region3: #{tpu_custom_call.1} parent=1 // loop_header
      %s12 = sphi 0, %s16
      %p13 = scmp.ge.s32.totalorder %s12, 4
      %s19 = sphi 0, %s38
      %s20 = sphi 0, %s34
      %s21 = sphi 0, %s30
      %s22 = sphi 0, %s19
      %s23 = sphi 0, %s20
      %s24 = sphi 0, %s21
      %s25 = sphi 0, %s22
      %s26 = sphi 0, %s23
      %s27 = sphi 0, %s24
      %s49 = sphi 0, %s51
      %s52 = sphi 0, %s49
      %s53 = sphi 0, %s52
      %s69 = sphi 0, %s53
      %s83 = sphi 0, %s85
      %s86 = sphi 0, %s83
      %s87 = sphi 0, %s86
      %s103 = sphi 0, %s87
      %s107 = sphi 0, %s107
      %s109 = sphi 0, %s107
      %s110 = sphi 0, %s109
      %s124 = sphi 0, %s110
      %s130 = sphi 0, %s132
      %s133 = sphi 0, %s130
      %s134 = sphi 0, %s133
      %s150 = sphi 0, %s134
    $region4: #{tpu_custom_call.1} parent=1 // loop_header_branch
      %15 = sbr.rel (%p13) target = $region8
    $region5: #{tpu_custom_call.1} parent=1 // loop_body
      %s17 = ssub.s32 %s12, 1
      %s18 = ssub.s32 %s12, 2
      %s28 = sadd.s32 1, %s21
      %p29 = scmp.ge.s32.totalorder %s28, 1
      %s30 = scalar_select %p29, 0, %s28
      %s31 = sadd.s32 1, %s20
      %s32 = scalar_select %p29, %s31, %s20
      %p33 = scmp.ge.s32.totalorder %s32, 1
      %s34 = scalar_select %p33, 0, %s32
      %s35 = sadd.s32 1, %s19
      %s36 = scalar_select %p33, %s35, %s19
      %p37 = scmp.ge.s32.totalorder %s36, 2
      %s38 = scalar_select %p37, 0, %s36
      %s39 = sadd.s32 %s19, %s20
      %p40 = scmp.lt.s32.totalorder %s39, 0
      %s41 = scalar_select %p40, %s39, 0
      %s42 = sadd.s32 %s38, %s34
      %p43 = scmp.lt.s32.totalorder %s42, 0
      %s44 = scalar_select %p43, %s42, 0
      %s45 = ssub.s32 %s41, %s44
      %s46 = ssub.s32 %s21, %s30
      %s47 = sor.u32 %s45, %s46
      %p48 = scmp.eq.s32.totalorder %s47, 0
      %s50 = sadd.s32 %s49, 1
      %s51 = scalar_select %p48, %s49, %s50
      %p54 = pneg %p48
      %p55 = scmp.eq.s32.totalorder %s12, 1
      %p56 = por %p54, %p55
      %p57 = scmp.ne.s32.totalorder %s49, %s52
      %p58 = scmp.eq.s32.totalorder %s12, 0
      %p59 = por %p57, %p58
      %p60 = scmp.ne.s32.totalorder %s49, %s52
      %p61 = scmp.eq.s32.totalorder %s17, 1
      %p62 = por %p60, %p61
      %p63 = scmp.ne.s32.totalorder %s52, %s53
      %p64 = scmp.eq.s32.totalorder %s17, 0
      %p65 = por %p63, %p64
      %p66 = scmp.ne.s32.totalorder %s52, %s53
      %p67 = scmp.eq.s32.totalorder %s18, 1
      %p68 = por %p66, %p67
      %p70 = scmp.ne.s32.totalorder %s53, %s69
      %p71 = scmp.eq.s32.totalorder %s18, 0
      %p72 = por %p70, %p71
      %s73 = sadd.s32 %s19, %s20
      %p74 = scmp.lt.s32.totalorder %s73, 0
      %s75 = scalar_select %p74, %s73, 0
      %s76 = sadd.s32 %s38, %s34
      %p77 = scmp.lt.s32.totalorder %s76, 0
      %s78 = scalar_select %p77, %s76, 0
      %s79 = ssub.s32 %s75, %s78
      %s80 = ssub.s32 %s21, %s30
      %s81 = sor.u32 %s79, %s80
      %p82 = scmp.eq.s32.totalorder %s81, 0
      %s84 = sadd.s32 %s83, 1
      %s85 = scalar_select %p82, %s83, %s84
      %p88 = pneg %p82
      %p89 = scmp.eq.s32.totalorder %s12, 1
      %p90 = por %p88, %p89
      %p91 = scmp.ne.s32.totalorder %s83, %s86
      %p92 = scmp.eq.s32.totalorder %s12, 0
      %p93 = por %p91, %p92
      %p94 = scmp.ne.s32.totalorder %s83, %s86
      %p95 = scmp.eq.s32.totalorder %s17, 1
      %p96 = por %p94, %p95
      %p97 = scmp.ne.s32.totalorder %s86, %s87
      %p98 = scmp.eq.s32.totalorder %s17, 0
      %p99 = por %p97, %p98
      %p100 = scmp.ne.s32.totalorder %s86, %s87
      %p101 = scmp.eq.s32.totalorder %s18, 1
      %p102 = por %p100, %p101
      %p104 = scmp.ne.s32.totalorder %s87, %s103
      %p105 = scmp.eq.s32.totalorder %s18, 0
      %p106 = por %p104, %p105
      %s108 = sadd.s32 %s107, 1
      %p111 = scmp.eq.s32.totalorder %s12, 1
      %p112 = scmp.ne.s32.totalorder %s107, %s109
      %p113 = scmp.eq.s32.totalorder %s12, 0
      %p114 = por %p112, %p113
      %p115 = scmp.ne.s32.totalorder %s107, %s109
      %p116 = scmp.eq.s32.totalorder %s17, 1
      %p117 = por %p115, %p116
      %p118 = scmp.ne.s32.totalorder %s109, %s110
      %p119 = scmp.eq.s32.totalorder %s17, 0
      %p120 = por %p118, %p119
      %p121 = scmp.ne.s32.totalorder %s109, %s110
      %p122 = scmp.eq.s32.totalorder %s18, 1
      %p123 = por %p121, %p122
      %p125 = scmp.ne.s32.totalorder %s110, %s124
      %p126 = scmp.eq.s32.totalorder %s18, 0
      %p127 = por %p125, %p126
      %s128 = ssub.s32 %s19, %s38
      %p129 = scmp.eq.s32.totalorder %s128, 0
      %s131 = sadd.s32 %s130, 1
      %s132 = scalar_select %p129, %s130, %s131
      %p135 = pneg %p129
      %p136 = scmp.eq.s32.totalorder %s12, 1
      %p137 = por %p135, %p136
      %p138 = scmp.ne.s32.totalorder %s130, %s133
      %p139 = scmp.eq.s32.totalorder %s12, 0
      %p140 = por %p138, %p139
      %p141 = scmp.ne.s32.totalorder %s130, %s133
      %p142 = scmp.eq.s32.totalorder %s17, 1
      %p143 = por %p141, %p142
      %p144 = scmp.ne.s32.totalorder %s133, %s134
      %p145 = scmp.eq.s32.totalorder %s17, 0
      %p146 = por %p144, %p145
      %p147 = scmp.ne.s32.totalorder %s133, %s134
      %p148 = scmp.eq.s32.totalorder %s18, 1
      %p149 = por %p147, %p148
      %p151 = scmp.ne.s32.totalorder %s134, %s150
      %p152 = scmp.eq.s32.totalorder %s18, 0
      %p153 = por %p151, %p152
      %p154 = scmp.le.s32.totalorder 1, %s12
      %p155 = scmp.lt.s32.totalorder %s12, 3
      %p156 = pnand %p154, %p155
      %p157 = pneg %p156
      // Predicated region
      $region9: #{tpu_custom_call.1} parent=5 // pred_check
        _
      $region10: #{tpu_custom_call.1} parent=5 // pred_check_branch
        %159 = sbr.rel (%p156) target = $region12
      $region11: #{tpu_custom_call.1} parent=5 // pred_region
        %s160 = ssub.s32 %s12, 1
        // Predicated region
        $region13: #{tpu_custom_call.1} parent=11 // pred_check
          %p161 = pneg %p120
        $region14: #{tpu_custom_call.1} parent=11 // pred_check_branch
          %163 = sbr.rel (%p161) target = $region16
        $region15: #{tpu_custom_call.1} parent=11 // pred_region
          _
        $region16: #{tpu_custom_call.1} parent=11 // pred_fallthru
          _
      $region12: #{tpu_custom_call.1} parent=5 // pred_fallthru
        _
      %p164 = scmp.lt.s32.totalorder %s12, 2
      // Predicated region
      $region17: #{tpu_custom_call.1} parent=5 // pred_check
        %p165 = pneg %p164
      $region18: #{tpu_custom_call.1} parent=5 // pred_check_branch
        %167 = sbr.rel (%p165) target = $region20
      $region19: #{tpu_custom_call.1} parent=5 // pred_region
        // Predicated region
        $region21: #{tpu_custom_call.1} parent=19 // pred_check
          %p168 = pneg %p59
        $region22: #{tpu_custom_call.1} parent=19 // pred_check_branch
          %170 = sbr.rel (%p168) target = $region24
        $region23: #{tpu_custom_call.1} parent=19 // pred_region
          %s171 = sadd.s32 %s19, %s20
          %p172 = scmp.lt.s32.totalorder %s171, 0
          %s173 = scalar_select %p172, %s171, 0
          %p174 = scmp.lt.s32.totalorder %s173, 0
          %s175 = scalar_select %p174, %s173, 0
          %p176 = scmp.lt.s32.totalorder %s21, 0
          %s177 = scalar_select %p176, %s21, 0
          %s178 = sadd.s32 %s177, %s175
          %s179 = smul.addr %s178, 8
          %s180 = scalar_lea.vmem %s0, %s179
          %s181 = sadd.s32 %s19, %s20
          %p182 = scmp.lt.s32.totalorder %s181, 0
          %s183 = scalar_select %p182, %s181, 0
        $region24: #{tpu_custom_call.1} parent=19 // pred_fallthru
          _
        // Predicated region
        $region25: #{tpu_custom_call.1} parent=19 // pred_check
          %p184 = pneg %p93
        $region26: #{tpu_custom_call.1} parent=19 // pred_check_branch
          %186 = sbr.rel (%p184) target = $region28
        $region27: #{tpu_custom_call.1} parent=19 // pred_region
          %s187 = sadd.s32 %s19, %s20
          %p188 = scmp.lt.s32.totalorder %s187, 0
          %s189 = scalar_select %p188, %s187, 0
          %p190 = scmp.lt.s32.totalorder %s189, 0
          %s191 = scalar_select %p190, %s189, 0
          %p192 = scmp.lt.s32.totalorder %s21, 0
          %s193 = scalar_select %p192, %s21, 0
          %s194 = sadd.s32 %s193, %s191
          %s195 = smul.addr %s194, 8
          %s196 = scalar_lea.vmem %s1, %s195
          %s197 = sadd.s32 %s19, %s20
          %p198 = scmp.lt.s32.totalorder %s197, 0
          %s199 = scalar_select %p198, %s197, 0
        $region28: #{tpu_custom_call.1} parent=19 // pred_fallthru
          _
      $region20: #{tpu_custom_call.1} parent=5 // pred_fallthru
        _
      %p200 = scmp.le.s32.totalorder 1, %s12
      %p201 = scmp.lt.s32.totalorder %s12, 3
      %p202 = pnand %p200, %p201
      %p203 = pneg %p202
      // Predicated region
      $region29: #{tpu_custom_call.1} parent=5 // pred_check
        _
      $region30: #{tpu_custom_call.1} parent=5 // pred_check_branch
        %205 = sbr.rel (%p202) target = $region32
      $region31: #{tpu_custom_call.1} parent=5 // pred_region
        %s206 = ssub.s32 %s12, 1
        %s207 = sadd.s32 %s22, %s23
        %p208 = scmp.lt.s32.totalorder %s207, 0
        %s209 = scalar_select %p208, %s207, 0
        %p210 = scmp.lt.s32.totalorder %s209, 0
        %s211 = scalar_select %p210, %s209, 0
        %p212 = scmp.lt.s32.totalorder %s24, 0
        %s213 = scalar_select %p212, %s24, 0
        %s214 = sadd.s32 %s213, %s211
        %s215 = smul.addr %s214, 8
        %s216 = scalar_lea.vmem %s0, %s215
        %p217 = pneg %p65
        %p218 = pneg %p62
        %s219 = sadd.s32 %s22, %s23
        %p220 = scmp.lt.s32.totalorder %s219, 0
        %s221 = scalar_select %p220, %s219, 0
        %p222 = scmp.lt.s32.totalorder %s221, 0
        %s223 = scalar_select %p222, %s221, 0
        %p224 = scmp.lt.s32.totalorder %s24, 0
        %s225 = scalar_select %p224, %s24, 0
        %s226 = sadd.s32 %s225, %s223
        %s227 = smul.addr %s226, 8
        %s228 = scalar_lea.vmem %s1, %s227
        %p229 = pneg %p99
        %p230 = pneg %p96
        %p231 = pneg %p120
        %p232 = pneg %p117
        %p233 = pneg %p146
        %p234 = pneg %p143
        %s235 = sand.u32 %s133, 1
        %s236 = scalar_lea.sflag [#allocation5], %s235
        %s237 = sand.u32 %s133, 1
        %s238 = smul.addr %s237, 8
        %s239 = scalar_lea.vmem [#allocation4], %s238
        %s240 = sadd.s32 %s22, %s23
        %p241 = scmp.lt.s32.totalorder %s240, 0
        %s242 = scalar_select %p241, %s240, 0
        %p243 = scmp.lt.s32.totalorder %s242, 0
        %s244 = scalar_select %p243, %s242, 0
        %p245 = scmp.lt.s32.totalorder %s24, 0
        %s246 = scalar_select %p245, %s24, 0
        %s247 = sadd.s32 %s246, %s244
        %s248 = smul.addr %s247, 8
        %s249 = scalar_lea.vmem %s0, %s248
        %s250 = sadd.s32 %s22, %s23
        %p251 = scmp.lt.s32.totalorder %s250, 0
        %s252 = scalar_select %p251, %s250, 0
        %s253 = sadd.s32 %s22, %s23
        %p254 = scmp.lt.s32.totalorder %s253, 0
        %s255 = scalar_select %p254, %s253, 0
        %p256 = scmp.lt.s32.totalorder %s255, 0
        %s257 = scalar_select %p256, %s255, 0
        %p258 = scmp.lt.s32.totalorder %s24, 0
        %s259 = scalar_select %p258, %s24, 0
        %s260 = sadd.s32 %s259, %s257
        %s261 = smul.addr %s260, 8
        %s262 = scalar_lea.vmem %s1, %s261
        %s263 = sadd.s32 %s22, %s23
        %p264 = scmp.lt.s32.totalorder %s263, 0
        %s265 = scalar_select %p264, %s263, 0
        %p266 = scmp.eq.s32.totalorder %s23, 0
        %p267 = scmp.eq.s32.totalorder %s24, 0
        %p268 = pnand %p266, %p267
        %p269 = pneg %p268
        // Predicated region
        $region33: #{tpu_custom_call.1} parent=31 // pred_check
          _
        $region34: #{tpu_custom_call.1} parent=31 // pred_check_branch
          %271 = sbr.rel (%p268) target = $region36
        $region35: #{tpu_custom_call.1} parent=31 // pred_region
          %vm272 = vcmask 0
          %273 = vst.msk [vmem:[#allocation2] sm:$0x1] %vm272, 0.0
        $region36: #{tpu_custom_call.1} parent=31 // pred_fallthru
          _
        // Predicated region
        $region37: #{tpu_custom_call.1} parent=31 // pred_check
          %p274 = pneg %p267
        $region38: #{tpu_custom_call.1} parent=31 // pred_check_branch
          %276 = sbr.rel (%p274) target = $region40
        $region39: #{tpu_custom_call.1} parent=31 // pred_region
          %vm277 = vcmask 7168
          %278 = vst.msk [vmem:[#allocation3] sm:$0xff] %vm277, 0.0
        $region40: #{tpu_custom_call.1} parent=31 // pred_fallthru
          _
        %v279 = vld [vmem:[%s249] sm:$0xff]
        %v280 = vld [vmem:[%s262] sm:$0xff]
        %v281 = vsub.f32 %v280, %v279
        %v282 = vmul.f32 %v281, %v281
        %v283 = vld [vmem:[#allocation3] sm:$0xff]
        %vm284 = vcmask 261120
        %v285 = vsel %vm284, %v282, 0.0
        %286 = vadd.xlane.f32.xlu0 %v285
        %v287 = vpop.xlane.xlu0 %286
        %v288 = vadd.f32 %v283, %v287
        %vm289 = vcmask 7168
        %290 = vst.msk [vmem:[#allocation3] sm:$0xff] %vm289, %v288
        // Predicated region
        $region41: #{tpu_custom_call.1} parent=31 // pred_check
          %p291 = pneg %p267
        $region42: #{tpu_custom_call.1} parent=31 // pred_check_branch
          %293 = sbr.rel (%p291) target = $region44
        $region43: #{tpu_custom_call.1} parent=31 // pred_region
          %s294 = sadd.s32 %s22, %s23
          %s295 = smul.u32 %s294, 8
          %v296 = vld [vmem:[#allocation3] sm:$0xff]
          %v297 = vmul.f32 %v296, 1000.0
          %v298 = vadd.f32 %v297, 0.001
          %s299 = scalar_lea.vmem %s2, %s295
          %v300 = vld [vmem:[%s299] sm:$0xff]
          %v301 = vrsqrt.pop %v298
          %v302 = vmul.f32 %v298, %v301
          %vm303 = vcmp.eq.f32.partialorder %v298, inf
          %v304 = vsel %vm303, %v298, %v302
          %vm305 = vcmp.eq.f32.partialorder %v298, 0.0
          %v306 = vand.u32 %v298, 2147483648
          %v307 = vsel %vm305, %v306, %v304
          %v308 = vsub.f32 1.0, %v307
          %v309 = vmax.f32 %v308, 0.0
          %v310 = vmul.f32 %v300, %v298
          %v311 = vsub.f32 1.0, %v300
          %v312 = vmul.f32 %v311, %v309
          %v313 = vmul.f32 %v312, %v309
          %v314 = vadd.f32 %v310, %v313
          %v315 = vmul.f32 %v314, 0.5
          %v316 = vlaneseq
          %v317 = vshrl.u32 %v316, 7
          %v318 = vstv %s295
          %v319 = vadd.s32 %v318, %v317
          %vm320 = vcmp.lt.s32.totalorder %v319, 8
          %v321 = vsel %vm320, %v315, 0.0
          %v322 = vld [vmem:[#allocation2] sm:$0x1]
          %v323 = vsel %vm289, %v321, 0.0
          %v324 = vrot.slane %v323, 4
          %v325 = vadd.f32 %v323, %v324
          %v326 = vrot.slane %v325, 2
          %v327 = vadd.f32 %v325, %v326
          %v328 = vrot.slane %v327, 1
          %v329 = vadd.f32 %v327, %v328
          %v330 = vadd.f32 %v322, %v329
          %vm331 = vcmask 0
          %332 = vst.msk [vmem:[#allocation2] sm:$0x1] %vm331, %v330
        $region44: #{tpu_custom_call.1} parent=31 // pred_fallthru
          _
        // Predicated region
        $region45: #{tpu_custom_call.1} parent=31 // pred_check
          _
        $region46: #{tpu_custom_call.1} parent=31 // pred_check_branch
          %334 = sbr.rel (%p268) target = $region48
        $region47: #{tpu_custom_call.1} parent=31 // pred_region
          %v335 = vld [vmem:[#allocation2] sm:$0x1]
          %v336 = vmul.f32 %v335, 0.125
          %v338 = vlaneseq
          %v339 = vshrl.u32 %v338, 7
          %v340 = vsub.s32 0, %v339
          %v341 = vrot.slane %v336, %v340
          %342 = vset.pattern.permute.xlu0 0
          %343 = vperm.xlu0 %342, %v341
          %v344 = vpop.permute.xlu0 %343
          %346 = vst [vmem:[%s239] sm:$0xff] %v344
        $region48: #{tpu_custom_call.1} parent=31 // pred_fallthru
          _
        %s347 = sand.u32 %s133, 1
        %s348 = scalar_lea.sflag [#allocation5], %s347
        %s349 = sand.u32 %s133, 1
        %s350 = smul.addr %s349, 8
        %s351 = scalar_lea.vmem [#allocation4], %s350
        // Predicated region
        $region49: #{tpu_custom_call.1} parent=31 // pred_check
          %p352 = pneg %p143
        $region50: #{tpu_custom_call.1} parent=31 // pred_check_branch
          %354 = sbr.rel (%p352) target = $region52
        $region51: #{tpu_custom_call.1} parent=31 // pred_region
          %s356 = ssub.s32 128, 128
          %357 = vsyncadd %s348, %s356
          %s358 = smul.addr %s22, 128
          %s359 = scalar_lea.hbm %s3, %s358
          %s361 = sshll.u32 %s351, 4
          %s362 = int_to_ptr.vmem [resolvable:$true] %s361
          %364 = dma.vmem_to_hbm [thread:$0]  %s362, 128, %s359, %s348
        $region52: #{tpu_custom_call.1} parent=31 // pred_fallthru
          _
      $region32: #{tpu_custom_call.1} parent=5 // pred_fallthru
        _
      %p365 = scmp.le.s32.totalorder 2, %s12
      // Predicated region
      $region53: #{tpu_custom_call.1} parent=5 // pred_check
        %p366 = pneg %p365
      $region54: #{tpu_custom_call.1} parent=5 // pred_check_branch
        %368 = sbr.rel (%p366) target = $region56
      $region55: #{tpu_custom_call.1} parent=5 // pred_region
        %s369 = ssub.s32 %s12, 2
        // Predicated region
        $region57: #{tpu_custom_call.1} parent=55 // pred_check
          %p370 = pneg %p149
        $region58: #{tpu_custom_call.1} parent=55 // pred_check_branch
          %372 = sbr.rel (%p370) target = $region60
        $region59: #{tpu_custom_call.1} parent=55 // pred_region
          %s373 = sand.u32 %s134, 1
          %s374 = scalar_lea.sflag [#allocation5], %s373
          %s375 = sand.u32 %s134, 1
          %s376 = smul.addr %s375, 8
          %s377 = scalar_lea.vmem [#allocation4], %s376
          %378 = dma.done %s374, 128
        $region60: #{tpu_custom_call.1} parent=55 // pred_fallthru
          _
      $region56: #{tpu_custom_call.1} parent=5 // pred_fallthru
        _
    $region6: #{tpu_custom_call.1} parent=1 // loop_footer
      %s16 = sadd.s32 1, %s12
    $region7: #{tpu_custom_call.1} parent=1 // loop_footer_branch
      %11 = sbr.rel target = $region3
    $region8: #{tpu_custom_call.1} parent=1 // loop_exit
      _
    %379 = vsyncpa [#allocation5], 1
    %s380 = scalar_lea.sflag [#allocation5], 1
    %381 = vsyncpa %s380, 1

</llo_original>
